<compile_context>
chip_gen: v7x
topology: tpu7x:2x2x1
jax: 0.10.0
libtpu: 0.0.40
codegen_flags: <defaults>
</compile_context>

<pallas_src>
import functools

import jax
import jax.numpy as jnp
import numpy as np
from jax.experimental import pallas as pl
from jax.experimental.pallas import tpu as pltpu


def _round_up(x, m):
    return ((x + m - 1) // m) * m


def _stft_mag_kernel(chunks_ref, w_ref, out_ref, prev_ref, ext_ref, frames_ref,
                     acc_ref, *, tile_nt, hop, rr, carry, n_frames, f_pad, col_chunk):
    k = pl.program_id(1)
    n_cols = 2 * f_pad

    @pl.when(k == 0)
    def _init():
        acc_ref[...] = jnp.zeros_like(acc_ref)
        prev_ref[...] = jnp.zeros_like(prev_ref)

    # ---- in-kernel framing: assemble a (tile_nt, nfft) frame tile from hop-chunks ----
    # ext = [`carry` chunks carried from the previous tile | this tile's chunks].
    ext_ref[:carry, :] = prev_ref[...]
    ext_ref[carry:, :] = chunks_ref[0]
    # Carry the last `carry` chunks of this tile for the next grid step (k runs
    # sequentially for a fixed batch index; k==0 resets the carry above).
    prev_ref[...] = chunks_ref[0, tile_nt - carry:, :]
    # Frame row i of this tile starts at global chunk (k*tile_nt - carry + i); column
    # stripe j of the frame matrix is the chunk matrix shifted down by j rows.
    for j in range(rr):
        frames_ref[:, j * hop:(j + 1) * hop] = ext_ref[j:j + tile_nt, :]

    # Rows of this tile that are real frames (not pre-roll carry rows / tail padding).
    row = jax.lax.broadcasted_iota(jnp.int32, (tile_nt, 1), 0)
    frame_idx = k * tile_nt - carry + row
    maskf = ((frame_idx >= 0) & (frame_idx < n_frames)).astype(jnp.float32)

    # ---- column-chunked bf16 MXU matmul, square, reduce the frame axis ----
    for c0 in range(0, n_cols, col_chunk):
        y = jnp.dot(frames_ref[...], w_ref[:, c0:c0 + col_chunk],
                    preferred_element_type=jnp.float32)        # (tile_nt, col_chunk) f32
        acc_ref[:, c0:c0 + col_chunk] += jnp.sum(y * y * maskf, axis=0, keepdims=True)

    # ---- finalize: combine cos/sin halves, recover Nyquist from the sin-DC slot ----
    @pl.when(k == pl.num_programs(1) - 1)
    def _store():
        s = acc_ref[...]                       # (1, 2*f_pad) sum_t y^2
        cos2 = s[:, :f_pad]                    # bins 0..f_half-1 (cos^2 sums)
        sin2 = s[:, f_pad:]                    # lane 0 = Nyquist cos^2 sum, rest sin^2
        lane = jax.lax.broadcasted_iota(jnp.int32, (1, f_pad), 1)
        main = jnp.sqrt(cos2 + jnp.where(lane == 0, 0.0, sin2))   # bins 0..f_half-1
        nyq = jnp.sqrt(sin2)                                      # lane 0 = bin nfft/2
        out_ref[0] = jnp.concatenate([main, nyq], axis=-1)        # (1, 2*f_pad)


@functools.lru_cache(maxsize=None)
def _dft_weights_np(nfft, f_pad):
    """Window-folded one-sided DFT matrix, packed [cos(0..f_half-1) | nyq | sin(1..)]."""
    n = np.arange(nfft, dtype=np.float64)
    f_half = nfft // 2
    # torch.hann_window(nfft) (periodic): 0.5*(1 - cos(2*pi*n/nfft))
    window = 0.5 * (1.0 - np.cos(2.0 * np.pi * n / nfft))
    f = np.arange(f_half, dtype=np.float64)
    ang = 2.0 * np.pi * np.outer(n, f) / nfft
    w = np.zeros((nfft, 2 * f_pad), dtype=np.float32)
    w[:, :f_half] = window[:, None] * np.cos(ang)
    # The sin column of bin 0 is identically zero, so the Nyquist cosine column
    # (window * (-1)^n, whose sin part is zero) is stashed there instead.
    w[:, f_pad] = window * np.cos(np.pi * n)
    w[:, f_pad + 1:f_pad + f_half] = -window[:, None] * np.sin(ang[:, 1:])
    return w


def stft_mag_pallas(x, nfft=1024, hop=256, tile_nt=512, col_chunk=256):
    B, T = x.shape
    if nfft % hop != 0:
        # TODO(synk): general hop (frame starts not chunk-aligned) needs a different
        # in-kernel framing decomposition; module defaults (1024/256) satisfy this.
        raise NotImplementedError("stft_mag_pallas requires nfft % hop == 0")
    assert T > nfft // 2, "center=True reflect padding requires T > nfft//2"

    rr = nfft // hop
    pad = nfft // 2
    n_frames = 1 + T // hop
    f_half = nfft // 2
    f_pad = _round_up(f_half, 128)          # lane-dense; == f_half when nfft % 256 == 0
    n_cols = 2 * f_pad

    carry = _round_up(max(rr - 1, 1), 8)    # chunk carry, padded for sublane alignment
    tile_nt = _round_up(min(tile_nt, n_frames + carry), 8)
    tile_nt = max(tile_nt, carry)
    n_chunks_needed = -(-(T + 2 * pad) // hop)
    n_tiles = -(-max(n_frames + carry, n_chunks_needed) // tile_nt)
    n_chunks = n_tiles * tile_nt

    col_chunk = min(col_chunk, n_cols)
    if n_cols % col_chunk != 0:
        col_chunk = 128                      # n_cols is always a multiple of 256

    # Wrapper glue: reflect pad (torch center=True), cast once to bf16, chop into
    # hop-sized chunks.  Total HBM traffic ~ read x + write (T+nfft) bf16 (no gather).
    xp = jnp.pad(x.astype(jnp.float32), ((0, 0), (pad, pad)), mode="reflect")
    xp = xp.astype(jnp.bfloat16)
    xp = jnp.pad(xp, ((0, 0), (0, n_chunks * hop - (T + 2 * pad))))
    chunks = xp.reshape(B, n_chunks, hop)

    w = jnp.asarray(_dft_weights_np(nfft, f_pad), dtype=jnp.bfloat16)  # (nfft, 2*f_pad)

    kernel = functools.partial(
        _stft_mag_kernel, tile_nt=tile_nt, hop=hop, rr=rr, carry=carry,
        n_frames=n_frames, f_pad=f_pad, col_chunk=col_chunk)

    # VMEM budget from the actual buffer set (+ headroom), capped for v7x (64 MiB).
    vmem_bytes = (2 * tile_nt * hop * 2            # chunk tile, double-buffered, bf16
                  + 2 * nfft * n_cols * 2          # W (constant index_map), bf16
                  + (tile_nt + 2 * carry) * hop * 2  # ext + prev scratch
                  + tile_nt * nfft * 2             # assembled frame tile, bf16
                  + tile_nt * col_chunk * 4        # f32 matmul intermediate
                  + 4 * n_cols * 8)                # acc + out
    vmem_limit = min(48 * 1024 * 1024, max(32 * 1024 * 1024, int(1.5 * vmem_bytes)))

    out = pl.pallas_call(
        kernel,
        out_shape=jax.ShapeDtypeStruct((B, 1, n_cols), jnp.float32),
        grid=(B, n_tiles),
        in_specs=[
            pl.BlockSpec((1, tile_nt, hop), lambda b, k: (b, k, 0)),
            # Constant index_map -> fetched once; pl.Buffered(1) would halve its VMEM
            # footprint but is unnecessary at this budget.
            pl.BlockSpec((nfft, n_cols), lambda b, k: (0, 0)),
        ],
        out_specs=pl.BlockSpec((1, 1, n_cols), lambda b, k: (b, 0, 0)),
        scratch_shapes=[
            pltpu.VMEM((carry, hop), jnp.bfloat16),            # chunk carry
            pltpu.VMEM((tile_nt + carry, hop), jnp.bfloat16),  # extended chunk window
            pltpu.VMEM((tile_nt, nfft), jnp.bfloat16),         # assembled frame tile
            pltpu.VMEM((1, n_cols), jnp.float32),              # sum_t y^2 accumulator
        ],
        compiler_params=pltpu.CompilerParams(
            dimension_semantics=("parallel", "arbitrary"),
            vmem_limit_bytes=vmem_limit,
        ),
    )(chunks, w)

    out = out.reshape(B, n_cols)
    # Bins 0..nfft/2-1 live in the cos half; bin nfft/2 (Nyquist) was stashed at column f_pad.
    return jnp.concatenate([out[:, :f_half], out[:, f_pad:f_pad + 1]], axis=-1)


def stft_mag_ref(x, nfft=1024, hop=256):
    """Pure-JAX f32 reference of the same torch semantics (via rFFT)."""
    B, T = x.shape
    pad = nfft // 2
    xp = jnp.pad(x.astype(jnp.float32), ((0, 0), (pad, pad)), mode="reflect")
    n_frames = 1 + T // hop
    idx = jnp.arange(n_frames)[:, None] * hop + jnp.arange(nfft)[None, :]
    frames = xp[:, idx]                                  # (B, NT, nfft)
    n = jnp.arange(nfft, dtype=jnp.float32)
    window = 0.5 * (1.0 - jnp.cos(2.0 * jnp.pi * n / nfft))
    stft = jnp.fft.rfft(frames * window[None, None, :], axis=-1)   # (B, NT, F)
    return jnp.sqrt(jnp.sum(jnp.abs(stft) ** 2, axis=1))           # (B, F)


if __name__ == "__main__":
    key = jax.random.PRNGKey(0)
    B, T = 2, 4096
    nfft, hop = 256, 128          # small test config (module defaults are 1024/256)
    x = jax.random.normal(key, (B, T), dtype=jnp.float32)

    # tile_nt=16 -> several reduction tiles (exercises init / chunk-carry / masked
    # pre-roll and tail / finalize); col_chunk=128 exercises the column loop.
    out = stft_mag_pallas(x, nfft=nfft, hop=hop, tile_nt=16, col_chunk=128)
    out = jax.block_until_ready(out)

    ref = stft_mag_ref(x, nfft=nfft, hop=hop)
    assert out.shape == (B, nfft // 2 + 1), out.shape
    # bf16 matmul inputs with f32 accumulation -> loose-ish tolerance vs f32 FFT ref.
    np.testing.assert_allclose(np.asarray(out), np.asarray(ref), rtol=2e-2, atol=2e-2)
    print("KERNEL_OK")
</pallas_src>

<mosaic_0001>
module attributes {stable_mosaic.version = 11 : i64} {
  func.func @_stft_mag_kernel(%arg0: i32, %arg1: i32, %arg2: memref<1x16x128xbf16, #tpu.memory_space<vmem>>, %arg3: memref<256x256xbf16, #tpu.memory_space<vmem>>, %arg4: memref<1x1x256xf32, #tpu.memory_space<vmem>>, %arg5: memref<8x128xbf16, #tpu.memory_space<vmem>>, %arg6: memref<24x128xbf16, #tpu.memory_space<vmem>>, %arg7: memref<16x256xbf16, #tpu.memory_space<vmem>>, %arg8: memref<1x256xf32, #tpu.memory_space<vmem>>) attributes {dimension_semantics = [#tpu.dimension_semantics<parallel>, #tpu.dimension_semantics<arbitrary>], iteration_bounds = array<i64: 2, 3>, scalar_prefetch = 0 : i64, scratch_operands = 4 : i64, tpu.core_type = #tpu.core_type<tc>, window_params = [{transform_indices = @transform_0, window_bounds = array<i64: 1, 16, 128>}, {pipeline_mode = #tpu.pipeline_mode<synchronous>, transform_indices = @transform_1, window_bounds = array<i64: 256, 256>}, {transform_indices = @transform_2, window_bounds = array<i64: 1, 1, 256>}]} {
    %c0_i32 = arith.constant 0 : i32
    %0 = arith.cmpi eq, %arg1, %c0_i32 : i32
    %1 = arith.extui %0 : i1 to i32
    %c0_i32_0 = arith.constant 0 : i32
    %2 = arith.cmpi ne, %1, %c0_i32_0 : i32
    scf.if %2 {
      %cst_40 = arith.constant 0.000000e+00 : f32
      %52 = vector.broadcast %cst_40 : f32 to vector<1x256xf32>
      %c0_41 = arith.constant 0 : index
      %c0_42 = arith.constant 0 : index
      %53 = vector.load %arg8[%c0_41, %c0_42] : memref<1x256xf32, #tpu.memory_space<vmem>>, vector<1x256xf32>
      tpu.vector_store %arg8[%c0_41, %c0_42], %52 {strides = array<i32>} : memref<1x256xf32, #tpu.memory_space<vmem>>, vector<1x256xf32>,
      %cst_43 = arith.constant 0.000000e+00 : bf16
      %54 = vector.broadcast %cst_43 : bf16 to vector<8x128xbf16>
      %c0_44 = arith.constant 0 : index
      %c0_45 = arith.constant 0 : index
      %55 = vector.load %arg5[%c0_44, %c0_45] : memref<8x128xbf16, #tpu.memory_space<vmem>>, vector<8x128xbf16>
      tpu.vector_store %arg5[%c0_44, %c0_45], %54 {strides = array<i32>} : memref<8x128xbf16, #tpu.memory_space<vmem>>, vector<8x128xbf16>,
    } else {
    }
    %c0 = arith.constant 0 : index
    %c0_1 = arith.constant 0 : index
    %3 = vector.load %arg5[%c0, %c0_1] : memref<8x128xbf16, #tpu.memory_space<vmem>>, vector<8x128xbf16>
    %c0_2 = arith.constant 0 : index
    %c0_3 = arith.constant 0 : index
    %4 = vector.load %arg6[%c0_2, %c0_3] : memref<24x128xbf16, #tpu.memory_space<vmem>>, vector<8x128xbf16>
    tpu.vector_store %arg6[%c0_2, %c0_3], %3 {strides = array<i32>} : memref<24x128xbf16, #tpu.memory_space<vmem>>, vector<8x128xbf16>,
    %c0_4 = arith.constant 0 : index
    %c0_5 = arith.constant 0 : index
    %c0_6 = arith.constant 0 : index
    %5 = vector.load %arg2[%c0_4, %c0_5, %c0_6] : memref<1x16x128xbf16, #tpu.memory_space<vmem>>, vector<1x16x128xbf16>
    %6 = vector.shape_cast %5 : vector<1x16x128xbf16> to vector<16x128xbf16>
    %c8 = arith.constant 8 : index
    %c0_7 = arith.constant 0 : index
    %7 = vector.load %arg6[%c8, %c0_7] : memref<24x128xbf16, #tpu.memory_space<vmem>>, vector<16x128xbf16>
    tpu.vector_store %arg6[%c8, %c0_7], %6 {strides = array<i32>} : memref<24x128xbf16, #tpu.memory_space<vmem>>, vector<16x128xbf16>,
    %c0_8 = arith.constant 0 : index
    %c8_9 = arith.constant 8 : index
    %c0_10 = arith.constant 0 : index
    %8 = vector.load %arg2[%c0_8, %c8_9, %c0_10] : memref<1x16x128xbf16, #tpu.memory_space<vmem>>, vector<1x8x128xbf16>
    %9 = vector.shape_cast %8 : vector<1x8x128xbf16> to vector<8x128xbf16>
    %c0_11 = arith.constant 0 : index
    %c0_12 = arith.constant 0 : index
    %10 = vector.load %arg5[%c0_11, %c0_12] : memref<8x128xbf16, #tpu.memory_space<vmem>>, vector<8x128xbf16>
    tpu.vector_store %arg5[%c0_11, %c0_12], %9 {strides = array<i32>} : memref<8x128xbf16, #tpu.memory_space<vmem>>, vector<8x128xbf16>,
    %c0_13 = arith.constant 0 : index
    %c0_14 = arith.constant 0 : index
    %11 = vector.load %arg6[%c0_13, %c0_14] : memref<24x128xbf16, #tpu.memory_space<vmem>>, vector<16x128xbf16>
    %c0_15 = arith.constant 0 : index
    %c0_16 = arith.constant 0 : index
    %12 = vector.load %arg7[%c0_15, %c0_16] : memref<16x256xbf16, #tpu.memory_space<vmem>>, vector<16x128xbf16>
    tpu.vector_store %arg7[%c0_15, %c0_16], %11 {strides = array<i32>} : memref<16x256xbf16, #tpu.memory_space<vmem>>, vector<16x128xbf16>,
    %c1 = arith.constant 1 : index
    %c0_17 = arith.constant 0 : index
    %13 = vector.load %arg6[%c1, %c0_17] : memref<24x128xbf16, #tpu.memory_space<vmem>>, vector<16x128xbf16>
    %c0_18 = arith.constant 0 : index
    %c128 = arith.constant 128 : index
    %14 = vector.load %arg7[%c0_18, %c128] : memref<16x256xbf16, #tpu.memory_space<vmem>>, vector<16x128xbf16>
    tpu.vector_store %arg7[%c0_18, %c128], %13 {strides = array<i32>} : memref<16x256xbf16, #tpu.memory_space<vmem>>, vector<16x128xbf16>,
    %15 = tpu.iota {dimensions = array<i32: 0>} : vector<16x1xi32>
    %c16_i32 = arith.constant 16 : i32
    %16 = arith.muli %arg1, %c16_i32 : i32
    %c8_i32 = arith.constant 8 : i32
    %17 = arith.subi %16, %c8_i32 : i32
    %18 = vector.broadcast %17 : i32 to vector<16x1xi32>
    %19 = arith.addi %18, %15 : vector<16x1xi32>
    %c0_i32_19 = arith.constant 0 : i32
    %20 = vector.broadcast %c0_i32_19 : i32 to vector<16x1xi32>
    %21 = arith.cmpi sge, %19, %20 : vector<16x1xi32>
    %c33_i32 = arith.constant 33 : i32
    %22 = vector.broadcast %c33_i32 : i32 to vector<16x1xi32>
    %23 = arith.cmpi slt, %19, %22 : vector<16x1xi32>
    %24 = arith.andi %21, %23 : vector<16x1xi1>
    %25 = arith.extui %24 : vector<16x1xi1> to vector<16x1xi32>
    %26 = arith.sitofp %25 : vector<16x1xi32> to vector<16x1xf32>
    %c0_20 = arith.constant 0 : index
    %c0_21 = arith.constant 0 : index
    %27 = vector.load %arg7[%c0_20, %c0_21] : memref<16x256xbf16, #tpu.memory_space<vmem>>, vector<16x256xbf16>
    %c0_22 = arith.constant 0 : index
    %c0_23 = arith.constant 0 : index
    %28 = vector.load %arg3[%c0_22, %c0_23] : memref<256x256xbf16, #tpu.memory_space<vmem>>, vector<256x128xbf16>
    %cst = arith.constant dense<0.000000e+00> : vector<16x128xf32>
    %29 = tpu.matmul %27, %28, %cst {dimension_numbers = #tpu.dot_dimension_numbers<[1], [0], [0], [1], [0, 0, 1, 1], [], []>} : vector<16x256xbf16>, vector<256x128xbf16>, vector<16x128xf32> -> vector<16x128xf32>
    %c0_24 = arith.constant 0 : index
    %c0_25 = arith.constant 0 : index
    %30 = vector.load %arg8[%c0_24, %c0_25] : memref<1x256xf32, #tpu.memory_space<vmem>>, vector<1x128xf32>
    %31 = arith.mulf %29, %29 : vector<16x128xf32>
    %32 = vector.broadcast %26 : vector<16x1xf32> to vector<16x128xf32>
    %33 = arith.mulf %31, %32 : vector<16x128xf32>
    %cst_26 = arith.constant dense<0.000000e+00> : vector<128xf32>
    %34 = vector.multi_reduction <add>, %33, %cst_26 [0] : vector<16x128xf32> to vector<128xf32>
    %35 = vector.shape_cast %34 : vector<128xf32> to vector<1x128xf32>
    %36 = arith.addf %30, %35 : vector<1x128xf32>
    %c0_27 = arith.constant 0 : index
    %c0_28 = arith.constant 0 : index
    %37 = vector.load %arg8[%c0_27, %c0_28] : memref<1x256xf32, #tpu.memory_space<vmem>>, vector<1x128xf32>
    tpu.vector_store %arg8[%c0_27, %c0_28], %36 {strides = array<i32>} : memref<1x256xf32, #tpu.memory_space<vmem>>, vector<1x128xf32>,
    %c0_29 = arith.constant 0 : index
    %c0_30 = arith.constant 0 : index
    %38 = vector.load %arg7[%c0_29, %c0_30] : memref<16x256xbf16, #tpu.memory_space<vmem>>, vector<16x256xbf16>
    %c0_31 = arith.constant 0 : index
    %c128_32 = arith.constant 128 : index
    %39 = vector.load %arg3[%c0_31, %c128_32] : memref<256x256xbf16, #tpu.memory_space<vmem>>, vector<256x128xbf16>
    %cst_33 = arith.constant dense<0.000000e+00> : vector<16x128xf32>
    %40 = tpu.matmul %38, %39, %cst_33 {dimension_numbers = #tpu.dot_dimension_numbers<[1], [0], [0], [1], [0, 0, 1, 1], [], []>} : vector<16x256xbf16>, vector<256x128xbf16>, vector<16x128xf32> -> vector<16x128xf32>
    %c0_34 = arith.constant 0 : index
    %c128_35 = arith.constant 128 : index
    %41 = vector.load %arg8[%c0_34, %c128_35] : memref<1x256xf32, #tpu.memory_space<vmem>>, vector<1x128xf32>
    %42 = arith.mulf %40, %40 : vector<16x128xf32>
    %43 = vector.broadcast %26 : vector<16x1xf32> to vector<16x128xf32>
    %44 = arith.mulf %42, %43 : vector<16x128xf32>
    %cst_36 = arith.constant dense<0.000000e+00> : vector<128xf32>
    %45 = vector.multi_reduction <add>, %44, %cst_36 [0] : vector<16x128xf32> to vector<128xf32>
    %46 = vector.shape_cast %45 : vector<128xf32> to vector<1x128xf32>
    %47 = arith.addf %41, %46 : vector<1x128xf32>
    %c0_37 = arith.constant 0 : index
    %c128_38 = arith.constant 128 : index
    %48 = vector.load %arg8[%c0_37, %c128_38] : memref<1x256xf32, #tpu.memory_space<vmem>>, vector<1x128xf32>
    tpu.vector_store %arg8[%c0_37, %c128_38], %47 {strides = array<i32>} : memref<1x256xf32, #tpu.memory_space<vmem>>, vector<1x128xf32>,
    %c2_i32 = arith.constant 2 : i32
    %49 = arith.cmpi eq, %arg1, %c2_i32 : i32
    %50 = arith.extui %49 : i1 to i32
    %c0_i32_39 = arith.constant 0 : i32
    %51 = arith.cmpi ne, %50, %c0_i32_39 : i32
    scf.if %51 {
      %c0_40 = arith.constant 0 : index
      %c0_41 = arith.constant 0 : index
      %52 = vector.load %arg8[%c0_40, %c0_41] : memref<1x256xf32, #tpu.memory_space<vmem>>, vector<1x256xf32>
      %53 = vector.extract_strided_slice %52 {offsets = [0, 0], sizes = [1, 128], strides = [1, 1]} : vector<1x256xf32> to vector<1x128xf32>
      %54 = vector.extract_strided_slice %52 {offsets = [0, 128], sizes = [1, 128], strides = [1, 1]} : vector<1x256xf32> to vector<1x128xf32>
      %55 = tpu.iota {dimensions = array<i32: 1>} : vector<1x128xi32>
      %c0_i32_42 = arith.constant 0 : i32
      %56 = vector.broadcast %c0_i32_42 : i32 to vector<1x128xi32>
      %57 = arith.cmpi eq, %55, %56 : vector<1x128xi32>
      %cst_43 = arith.constant 0.000000e+00 : f32
      %58 = vector.broadcast %cst_43 : f32 to vector<1x128xf32>
      %59 = arith.select %57, %58, %54 : vector<1x128xi1>, vector<1x128xf32>
      %60 = arith.addf %53, %59 : vector<1x128xf32>
      %61 = math.sqrt %60 : vector<1x128xf32>
      %62 = math.sqrt %54 : vector<1x128xf32>
      %63 = tpu.concatenate %61, %62 in 1 : vector<1x128xf32>, vector<1x128xf32> -> vector<1x256xf32>
      %c0_44 = arith.constant 0 : index
      %c0_45 = arith.constant 0 : index
      %c0_46 = arith.constant 0 : index
      %64 = vector.load %arg4[%c0_44, %c0_45, %c0_46] : memref<1x1x256xf32, #tpu.memory_space<vmem>>, vector<1x1x256xf32>
      %65 = vector.shape_cast %64 : vector<1x1x256xf32> to vector<1x256xf32>
      %66 = vector.shape_cast %63 : vector<1x256xf32> to vector<1x1x256xf32>
      tpu.vector_store %arg4[%c0_44, %c0_45, %c0_46], %66 {strides = array<i32>} : memref<1x1x256xf32, #tpu.memory_space<vmem>>, vector<1x1x256xf32>,
    } else {
    }
    return
  }
  func.func @transform_0(%arg0: i32, %arg1: i32) -> (i32, i32, i32) {
    %c0_i32 = arith.constant 0 : i32
    %c0_i32_0 = arith.constant 0 : i32
    return %arg0, %arg1, %c0_i32 : i32, i32, i32
  }
  func.func @transform_1(%arg0: i32, %arg1: i32) -> (i32, i32) {
    %c0_i32 = arith.constant 0 : i32
    %c0_i32_0 = arith.constant 0 : i32
    %c0_i32_1 = arith.constant 0 : i32
    return %c0_i32, %c0_i32_0 : i32, i32
  }
  func.func @transform_2(%arg0: i32, %arg1: i32) -> (i32, i32, i32) {
    %c0_i32 = arith.constant 0 : i32
    %c0_i32_0 = arith.constant 0 : i32
    %c0_i32_1 = arith.constant 0 : i32
    return %arg0, %c0_i32, %c0_i32_0 : i32, i32, i32
  }
}

</mosaic_0001>

<llo_original>
// kernel: tpu_custom_call.1
$region0: #{tpu_custom_call.1}
  #allocation0 [shape = 'u32[]', space=smem, size = 0x4, offset = 0x4, fixed_abs, tag = 'smem constant byte address 0x4 - core index']
  #allocation1 [shape = 'u32[144,128]{1,0:T(1,128)}', space=vmem, size = 0x12000, scoped, tag = 'internal scratch']
  #allocation2 [shape = 'bf16[8,128]{1,0:T(8,128)(2,1)}', space=vmem, size = 0x800, scoped, tag = 'scratch operand']
  #allocation3 [shape = 'bf16[24,128]{1,0:T(8,128)(2,1)}', space=vmem, size = 0x1800, scoped, tag = 'scratch operand']
  #allocation4 [shape = 'bf16[16,256]{1,0:T(16,128)(2,1)}', space=vmem, size = 0x2000, scoped, tag = 'scratch operand']
  #allocation5 [shape = 'f32[1,256]{1,0:T(1,128)}', space=vmem, size = 0x400, scoped, tag = 'scratch operand']
  %s0 = inlined_call_operand.hbm [shape: bf16[2,48,128], index: 0, kind: input, shape index: {}]
  %s1 = inlined_call_operand.hbm [shape: bf16[256,256], index: 1, kind: input, shape index: {}]
  %s2 = inlined_call_operand.hbm [shape: f32[2,1,256], index: 2, kind: output, shape index: {}]
  %s3 = sld [smem:[#allocation0]]
  $region57: #{tpu_custom_call.1} parent=0
    _
  %s5 = ssub.s32 1, %s3
  %s6 = scalar_select 0, %s5, %s3
  $region1: #{tpu_custom_call.1} parent=0
    #allocation6 [shape = 'u8[8192]{0}', space=vmem, size = 0x2000, scoped, tag = 'input window, operand 0']
    #allocation7 [shape = 's32[2]{0}', space=sflag, size = 0x8, scoped, tag = 'scoped memory for tpu_custom_call.1']
    #allocation8 [shape = 's32[2]{0}', space=sflag, size = 0x8, scoped, tag = 'scoped memory for tpu_custom_call.1']
    #allocation9 [shape = 'u8[131072]{0}', space=vmem, size = 0x20000, scoped, tag = 'input window, operand 1, single buffered']
    #allocation10 [shape = 's32[1]{0}', space=sflag, size = 0x4, scoped, tag = 'scoped memory for tpu_custom_call.1']
    #allocation11 [shape = 'u8[2048]{0}', space=vmem, size = 0x800, scoped, tag = 'output window, operand 0']
    %7 = vsyncpa [#allocation7], 0
    %s8 = scalar_lea.sflag [#allocation7], 1
    %9 = vsyncpa %s8, 0
    %10 = vsyncpa [#allocation10], 0
    %11 = vsyncpa [#allocation8], 0
    %s12 = scalar_lea.sflag [#allocation8], 1
    %13 = vsyncpa %s12, 0
    loop: start=0, step=1, limit=8
    $region2: #{tpu_custom_call.1} parent=1 // loop_pre_header
      _
    $region3: #{tpu_custom_call.1} parent=1 // loop_header
      %s15 = sphi 0, %s19
      %p16 = scmp.ge.s32.totalorder %s15, 8
      %s22 = sphi 0, %s34
      %s23 = sphi 0, %s30
      %s24 = sphi 0, %s22
      %s25 = sphi 0, %s23
      %s26 = sphi 0, %s24
      %s27 = sphi 0, %s25
      %s39 = sphi 0, %s41
      %s42 = sphi 0, %s39
      %s43 = sphi 0, %s42
      %s59 = sphi 0, %s43
      %s63 = sphi 0, %s63
      %s65 = sphi 0, %s63
      %s66 = sphi 0, %s65
      %s80 = sphi 0, %s66
      %s86 = sphi 0, %s88
      %s89 = sphi 0, %s86
      %s90 = sphi 0, %s89
      %s106 = sphi 0, %s90
    $region4: #{tpu_custom_call.1} parent=1 // loop_header_branch
      %18 = sbr.rel (%p16) target = $region8
    $region5: #{tpu_custom_call.1} parent=1 // loop_body
      %s20 = ssub.s32 %s15, 1
      %s21 = ssub.s32 %s15, 2
      %s28 = sadd.s32 1, %s23
      %p29 = scmp.ge.s32.totalorder %s28, 3
      %s30 = scalar_select %p29, 0, %s28
      %s31 = sadd.s32 1, %s22
      %s32 = scalar_select %p29, %s31, %s22
      %p33 = scmp.ge.s32.totalorder %s32, 2
      %s34 = scalar_select %p33, 0, %s32
      %s35 = ssub.s32 %s22, %s34
      %s36 = ssub.s32 %s23, %s30
      %s37 = sor.u32 %s35, %s36
      %p38 = scmp.eq.s32.totalorder %s37, 0
      %s40 = sadd.s32 %s39, 1
      %s41 = scalar_select %p38, %s39, %s40
      %p44 = pneg %p38
      %p45 = scmp.eq.s32.totalorder %s15, 5
      %p46 = por %p44, %p45
      %p47 = scmp.ne.s32.totalorder %s39, %s42
      %p48 = scmp.eq.s32.totalorder %s15, 0
      %p49 = por %p47, %p48
      %p50 = scmp.ne.s32.totalorder %s39, %s42
      %p51 = scmp.eq.s32.totalorder %s20, 5
      %p52 = por %p50, %p51
      %p53 = scmp.ne.s32.totalorder %s42, %s43
      %p54 = scmp.eq.s32.totalorder %s20, 0
      %p55 = por %p53, %p54
      %p56 = scmp.ne.s32.totalorder %s42, %s43
      %p57 = scmp.eq.s32.totalorder %s21, 5
      %p58 = por %p56, %p57
      %p60 = scmp.ne.s32.totalorder %s43, %s59
      %p61 = scmp.eq.s32.totalorder %s21, 0
      %p62 = por %p60, %p61
      %s64 = sadd.s32 %s63, 1
      %p67 = scmp.eq.s32.totalorder %s15, 5
      %p68 = scmp.ne.s32.totalorder %s63, %s65
      %p69 = scmp.eq.s32.totalorder %s15, 0
      %p70 = por %p68, %p69
      %p71 = scmp.ne.s32.totalorder %s63, %s65
      %p72 = scmp.eq.s32.totalorder %s20, 5
      %p73 = por %p71, %p72
      %p74 = scmp.ne.s32.totalorder %s65, %s66
      %p75 = scmp.eq.s32.totalorder %s20, 0
      %p76 = por %p74, %p75
      %p77 = scmp.ne.s32.totalorder %s65, %s66
      %p78 = scmp.eq.s32.totalorder %s21, 5
      %p79 = por %p77, %p78
      %p81 = scmp.ne.s32.totalorder %s66, %s80
      %p82 = scmp.eq.s32.totalorder %s21, 0
      %p83 = por %p81, %p82
      %s84 = ssub.s32 %s22, %s34
      %p85 = scmp.eq.s32.totalorder %s84, 0
      %s87 = sadd.s32 %s86, 1
      %s88 = scalar_select %p85, %s86, %s87
      %p91 = pneg %p85
      %p92 = scmp.eq.s32.totalorder %s15, 5
      %p93 = por %p91, %p92
      %p94 = scmp.ne.s32.totalorder %s86, %s89
      %p95 = scmp.eq.s32.totalorder %s15, 0
      %p96 = por %p94, %p95
      %p97 = scmp.ne.s32.totalorder %s86, %s89
      %p98 = scmp.eq.s32.totalorder %s20, 5
      %p99 = por %p97, %p98
      %p100 = scmp.ne.s32.totalorder %s89, %s90
      %p101 = scmp.eq.s32.totalorder %s20, 0
      %p102 = por %p100, %p101
      %p103 = scmp.ne.s32.totalorder %s89, %s90
      %p104 = scmp.eq.s32.totalorder %s21, 5
      %p105 = por %p103, %p104
      %p107 = scmp.ne.s32.totalorder %s90, %s106
      %p108 = scmp.eq.s32.totalorder %s21, 0
      %p109 = por %p107, %p108
      %p110 = scmp.le.s32.totalorder 1, %s15
      %p111 = scmp.lt.s32.totalorder %s15, 7
      %p112 = pnand %p110, %p111
      %p113 = pneg %p112
      // Predicated region
      $region9: #{tpu_custom_call.1} parent=5 // pred_check
        _
      $region10: #{tpu_custom_call.1} parent=5 // pred_check_branch
        %115 = sbr.rel (%p112) target = $region12
      $region11: #{tpu_custom_call.1} parent=5 // pred_region
        %s116 = ssub.s32 %s15, 1
        // Predicated region
        $region13: #{tpu_custom_call.1} parent=11 // pred_check
          %p117 = pneg %p76
        $region14: #{tpu_custom_call.1} parent=11 // pred_check_branch
          %119 = sbr.rel (%p117) target = $region16
        $region15: #{tpu_custom_call.1} parent=11 // pred_region
          %s121 = ssub.s32 4096, 4096
          %122 = vsyncadd [#allocation10], %s121
          %s123 = sshll.u32 [#allocation9], 4
          %s124 = int_to_ptr.vmem [resolvable:$true] %s123
          %129 = dma.hbm_to_vmem [thread:$0]  %s1, 4096, %s124, [#allocation10], 128, 128, 8
        $region16: #{tpu_custom_call.1} parent=11 // pred_fallthru
          _
      $region12: #{tpu_custom_call.1} parent=5 // pred_fallthru
        _
      %p130 = scmp.lt.s32.totalorder %s15, 6
      // Predicated region
      $region17: #{tpu_custom_call.1} parent=5 // pred_check
        %p131 = pneg %p130
      $region18: #{tpu_custom_call.1} parent=5 // pred_check_branch
        %133 = sbr.rel (%p131) target = $region20
      $region19: #{tpu_custom_call.1} parent=5 // pred_region
        // Predicated region
        $region21: #{tpu_custom_call.1} parent=19 // pred_check
          %p134 = pneg %p49
        $region22: #{tpu_custom_call.1} parent=19 // pred_check_branch
          %136 = sbr.rel (%p134) target = $region24
        $region23: #{tpu_custom_call.1} parent=19 // pred_region
          %s137 = sand.u32 %s39, 1
          %s138 = scalar_lea.sflag [#allocation7], %s137
          %s139 = sand.u32 %s39, 1
          %s140 = smul.addr %s139, 8
          %s141 = scalar_lea.vmem [#allocation6], %s140
          %s142 = smul.u32 2, %s23
          %s144 = ssub.s32 128, 128
          %145 = vsyncadd %s138, %s144
          %s146 = smul.addr %s22, 6
          %s147 = sadd.s32 %s142, %s146
          %s148 = smul.addr %s147, 64
          %s149 = scalar_lea.hbm %s0, %s148
          %s150 = sshll.u32 %s141, 4
          %s151 = int_to_ptr.vmem [resolvable:$true] %s150
          %156 = dma.hbm_to_vmem [thread:$0]  %s149, 128, %s151, %s138, 64, 64, 4
        $region24: #{tpu_custom_call.1} parent=19 // pred_fallthru
          _
      $region20: #{tpu_custom_call.1} parent=5 // pred_fallthru
        _
      %p157 = scmp.le.s32.totalorder 1, %s15
      %p158 = scmp.lt.s32.totalorder %s15, 7
      %p159 = pnand %p157, %p158
      %p160 = pneg %p159
      // Predicated region
      $region25: #{tpu_custom_call.1} parent=5 // pred_check
        _
      $region26: #{tpu_custom_call.1} parent=5 // pred_check_branch
        %162 = sbr.rel (%p159) target = $region28
      $region27: #{tpu_custom_call.1} parent=5 // pred_region
        %s163 = ssub.s32 %s15, 1
        %s164 = sand.u32 %s42, 1
        %s165 = scalar_lea.sflag [#allocation7], %s164
        %s166 = sand.u32 %s42, 1
        %s167 = smul.addr %s166, 8
        %s168 = scalar_lea.vmem [#allocation6], %s167
        // Predicated region
        $region29: #{tpu_custom_call.1} parent=27 // pred_check
          %p169 = pneg %p55
        $region30: #{tpu_custom_call.1} parent=27 // pred_check_branch
          %171 = sbr.rel (%p169) target = $region32
        $region31: #{tpu_custom_call.1} parent=27 // pred_region
          %172 = dma.done %s165, 128
        $region32: #{tpu_custom_call.1} parent=27 // pred_fallthru
          _
        // Predicated region
        $region33: #{tpu_custom_call.1} parent=27 // pred_check
          %p173 = pneg %p76
        $region34: #{tpu_custom_call.1} parent=27 // pred_check_branch
          %175 = sbr.rel (%p173) target = $region36
        $region35: #{tpu_custom_call.1} parent=27 // pred_region
          %176 = dma.done [#allocation10], 4096
        $region36: #{tpu_custom_call.1} parent=27 // pred_fallthru
          _
        %s177 = sand.u32 %s42, 1
        %s178 = scalar_lea.sflag [#allocation7], %s177
        %s179 = sand.u32 %s42, 1
        %s180 = smul.addr %s179, 8
        %s181 = scalar_lea.vmem [#allocation6], %s180
        %p182 = pneg %p55
        %p183 = pneg %p52
        %p184 = pneg %p76
        %p185 = pneg %p73
        %p186 = pneg %p102
        %p187 = pneg %p99
        %s188 = sand.u32 %s89, 1
        %s189 = scalar_lea.sflag [#allocation8], %s188
        %s190 = sand.u32 %s89, 1
        %s191 = smul.addr %s190, 2
        %s192 = scalar_lea.vmem [#allocation11], %s191
        %s193 = smul.u32 2, %s25
        %p195 = scmp.eq.s32.totalorder %s25, 0
        // Predicated region
        $region37: #{tpu_custom_call.1} parent=27 // pred_check
          %p196 = pneg %p195
        $region38: #{tpu_custom_call.1} parent=27 // pred_check_branch
          %198 = sbr.rel (%p196) target = $region40
        $region39: #{tpu_custom_call.1} parent=27 // pred_region
          %v199 = vlaneseq
          %vm200 = vcmp.ge.s32.totalorder %v199, 0
          %vm201 = vcmp.lt.s32.totalorder %v199, 256
          %vm202 = vmand %vm200, %vm201
          %203 = vst.msk [vmem:[#allocation5] sm:$0x3] %vm202, 0.0
          %204 = vst [vmem:[#allocation2] sm:$0xf] 0
        $region40: #{tpu_custom_call.1} parent=27 // pred_fallthru
          _
        %v205 = vld [vmem:[#allocation2] sm:$0xf]
        %206 = vst [vmem:[#allocation3] sm:$0xf] %v205
        %v207 = vld [vmem:[%s168] sm:$0xf]
        %v208 = vld [vmem:[%s168 + $0x4] sm:$0xf]
        %209 = vst [vmem:[#allocation3 + $0x4] sm:$0xf] %v207
        %210 = vst [vmem:[#allocation3 + $0x8] sm:$0xf] %v208
        %v211 = vld [vmem:[%s168 + $0x4] sm:$0xf]
        %212 = vst [vmem:[#allocation2] sm:$0xf] %v211
        %v213 = vld [vmem:[#allocation3] sm:$0xf]
        %v214 = vld [vmem:[#allocation3 + $0x4] sm:$0xf]
        %v217 = vunpack.c.l.b16 %v213
        %v218 = vunpack.c.l.b16 %v214
        %v219 = vpack.c.b16 %v218, %v217
        %221 = vst [vmem:[#allocation4] sm:$0xff] %v219
        %v222 = vld [vmem:[#allocation3] sm:$0xf]
        %v223 = vld [vmem:[#allocation3 + $0x4] sm:$0xf]
        %v224 = vld [vmem:[#allocation3 + $0x8] sm:$0x1]
        %v228 = vunpack.c.l.b16 %v222
        %v229 = vunpack.c.l.b16 %v223
        %v230 = vunpack.c.l.b16 %v224
        %v231 = vpack.c.b16 %v229, %v228
        %v232 = vpack.c.b16 %v230, %v230
        %vm233 = vsmask.f32 7424
        %v235 = vshrl.u32 %v231, 16
        %v237 = vshll.u32 %v231, 16
        %v239 = vrot.slane %v237, 1
        %v240 = vor.u32 %v235, %v239
        %v242 = vshll.u32 %v232, 16
        %v244 = vrot.slane %v242, 1
        %v245 = vsel %vm233, %v240, %v244
        %247 = vst [vmem:[#allocation4 + $0x8] sm:$0xff] %v245
        %v248 = vlaneseq
        %v249 = vshrl.u32 %v248, 7
        %v250 = vadd.s32 %v249, 8
        %s251 = smul.u32 %s25, 16
        %s252 = ssub.s32 %s251, 8
        %v253 = vstv %s252
        %v254 = vadd.s32 %v253, %v249
        %v255 = vadd.s32 %v253, %v250
        %vm256 = vcmp.ge.s32.totalorder %v254, 0
        %vm257 = vcmp.ge.s32.totalorder %v255, 0
        %vm258 = vcmp.lt.s32.totalorder %v254, 33
        %vm259 = vcmp.lt.s32.totalorder %v255, 33
        %vm260 = vmand %vm256, %vm258
        %vm261 = vmand %vm257, %vm259
        %v262 = vsel %vm260, 1, 0
        %v263 = vsel %vm261, 1, 0
        %v264 = vcvt.s32.f32 %v262
        %v265 = vcvt.s32.f32 %v263
        %v266 = vld [vmem:[#allocation4] sm:$0xff]
        %v267 = vld [vmem:[#allocation4 + $0x8] sm:$0xff]
        %v268 = vld [vmem:[#allocation9] sm:$0xf]
        %v269 = vld [vmem:[#allocation9 + $0x8] sm:$0xf]
        %v270 = vld [vmem:[#allocation9 + $0x10] sm:$0xf]
        %v271 = vld [vmem:[#allocation9 + $0x18] sm:$0xf]
        %v272 = vld [vmem:[#allocation9 + $0x20] sm:$0xf]
        %v273 = vld [vmem:[#allocation9 + $0x28] sm:$0xf]
        %v274 = vld [vmem:[#allocation9 + $0x30] sm:$0xf]
        %v275 = vld [vmem:[#allocation9 + $0x38] sm:$0xf]
        %v276 = vld [vmem:[#allocation9 + $0x40] sm:$0xf]
        %v277 = vld [vmem:[#allocation9 + $0x48] sm:$0xf]
        %v278 = vld [vmem:[#allocation9 + $0x50] sm:$0xf]
        %v279 = vld [vmem:[#allocation9 + $0x58] sm:$0xf]
        %v280 = vld [vmem:[#allocation9 + $0x60] sm:$0xf]
        %v281 = vld [vmem:[#allocation9 + $0x68] sm:$0xf]
        %v282 = vld [vmem:[#allocation9 + $0x70] sm:$0xf]
        %v283 = vld [vmem:[#allocation9 + $0x78] sm:$0xf]
        %v284 = vld [vmem:[#allocation9 + $0x80] sm:$0xf]
        %v285 = vld [vmem:[#allocation9 + $0x88] sm:$0xf]
        %v286 = vld [vmem:[#allocation9 + $0x90] sm:$0xf]
        %v287 = vld [vmem:[#allocation9 + $0x98] sm:$0xf]
        %v288 = vld [vmem:[#allocation9 + $0xa0] sm:$0xf]
        %v289 = vld [vmem:[#allocation9 + $0xa8] sm:$0xf]
        %v290 = vld [vmem:[#allocation9 + $0xb0] sm:$0xf]
        %v291 = vld [vmem:[#allocation9 + $0xb8] sm:$0xf]
        %v292 = vld [vmem:[#allocation9 + $0xc0] sm:$0xf]
        %v293 = vld [vmem:[#allocation9 + $0xc8] sm:$0xf]
        %v294 = vld [vmem:[#allocation9 + $0xd0] sm:$0xf]
        %v295 = vld [vmem:[#allocation9 + $0xd8] sm:$0xf]
        %v296 = vld [vmem:[#allocation9 + $0xe0] sm:$0xf]
        %v297 = vld [vmem:[#allocation9 + $0xe8] sm:$0xf]
        %v298 = vld [vmem:[#allocation9 + $0xf0] sm:$0xf]
        %v299 = vld [vmem:[#allocation9 + $0xf8] sm:$0xf]
        %v332 = vunpack.c.l.b16 %v268
        %v333 = vunpack.c.l.b16 %v269
        %v334 = vunpack.c.l.b16 %v270
        %v335 = vunpack.c.l.b16 %v271
        %v336 = vunpack.c.l.b16 %v272
        %v337 = vunpack.c.l.b16 %v273
        %v338 = vunpack.c.l.b16 %v274
        %v339 = vunpack.c.l.b16 %v275
        %v340 = vunpack.c.l.b16 %v276
        %v341 = vunpack.c.l.b16 %v277
        %v342 = vunpack.c.l.b16 %v278
        %v343 = vunpack.c.l.b16 %v279
        %v344 = vunpack.c.l.b16 %v280
        %v345 = vunpack.c.l.b16 %v281
        %v346 = vunpack.c.l.b16 %v282
        %v347 = vunpack.c.l.b16 %v283
        %v348 = vunpack.c.l.b16 %v284
        %v349 = vunpack.c.l.b16 %v285
        %v350 = vunpack.c.l.b16 %v286
        %v351 = vunpack.c.l.b16 %v287
        %v352 = vunpack.c.l.b16 %v288
        %v353 = vunpack.c.l.b16 %v289
        %v354 = vunpack.c.l.b16 %v290
        %v355 = vunpack.c.l.b16 %v291
        %v356 = vunpack.c.l.b16 %v292
        %v357 = vunpack.c.l.b16 %v293
        %v358 = vunpack.c.l.b16 %v294
        %v359 = vunpack.c.l.b16 %v295
        %v360 = vunpack.c.l.b16 %v296
        %v361 = vunpack.c.l.b16 %v297
        %v362 = vunpack.c.l.b16 %v298
        %v363 = vunpack.c.l.b16 %v299
        %v364 = vpack.c.b16 %v333, %v332
        %v365 = vpack.c.b16 %v335, %v334
        %v366 = vpack.c.b16 %v337, %v336
        %v367 = vpack.c.b16 %v339, %v338
        %v368 = vpack.c.b16 %v341, %v340
        %v369 = vpack.c.b16 %v343, %v342
        %v370 = vpack.c.b16 %v345, %v344
        %v371 = vpack.c.b16 %v347, %v346
        %v372 = vpack.c.b16 %v349, %v348
        %v373 = vpack.c.b16 %v351, %v350
        %v374 = vpack.c.b16 %v353, %v352
        %v375 = vpack.c.b16 %v355, %v354
        %v376 = vpack.c.b16 %v357, %v356
        %v377 = vpack.c.b16 %v359, %v358
        %v378 = vpack.c.b16 %v361, %v360
        %v379 = vpack.c.b16 %v363, %v362
        %396 = vmatprep.subr.bf16.mxu0 0
        %397 = vmatpush1.bf16.msra.mxu0 %v364
        %398 = vmatprep.subr.bf16.mxu0 0
        %399 = vmatpush1.bf16.msra.mxu0 %v365
        %400 = vmatprep.subr.bf16.mxu0 0
        %401 = vmatpush1.bf16.msra.mxu0 %v366
        %402 = vmatprep.subr.bf16.mxu0 0
        %403 = vmatpush1.bf16.msra.mxu0 %v367
        %404 = vmatprep.subr.bf16.mxu0 0
        %405 = vmatpush1.bf16.msra.mxu0 %v368
        %406 = vmatprep.subr.bf16.mxu0 0
        %407 = vmatpush1.bf16.msra.mxu0 %v369
        %408 = vmatprep.subr.bf16.mxu0 0
        %409 = vmatpush1.bf16.msra.mxu0 %v370
        %410 = vmatprep.subr.bf16.mxu0 0
        %411 = vmatpush1.bf16.msra.mxu0 %v371
        %412 = vmatprep.subr.bf16.mxu0 0
        %413 = vmatpush1.bf16.msra.mxu0 %v372
        %414 = vmatprep.subr.bf16.mxu0 0
        %415 = vmatpush1.bf16.msra.mxu0 %v373
        %416 = vmatprep.subr.bf16.mxu0 0
        %417 = vmatpush1.bf16.msra.mxu0 %v374
        %418 = vmatprep.subr.bf16.mxu0 0
        %419 = vmatpush1.bf16.msra.mxu0 %v375
        %420 = vmatprep.subr.bf16.mxu0 0
        %421 = vmatpush1.bf16.msra.mxu0 %v376
        %422 = vmatprep.subr.bf16.mxu0 0
        %423 = vmatpush1.bf16.msra.mxu0 %v377
        %424 = vmatprep.subr.bf16.mxu0 0
        %425 = vmatpush1.bf16.msra.mxu0 %v378
        %426 = vmatprep.subr.bf16.mxu0 0
        %427 = vmatpush1.bf16.msra.mxu0 %v379
        %428 = vmatprep.mubr.bf16.mxu0 %v267
        %429 = vmatmul.mubr.bf16.gmra.mrb[0].mxu0 %v266
        %v430 = vpop.f32.mrb[0].mxu0
        %v431 = vadd.f32 0.0, %v430
        %v432 = vpop.f32.mrb[0].mxu0
        %v433 = vpop.f32.mrb[0].mxu0
        %v434 = vadd.f32 0.0, %v433
        %v435 = vpop.f32.mrb[0].mxu0
        %436 = vdwg.mxu0
        %v437 = vld [vmem:[#allocation5] sm:$0x1]
        %v438 = vmul.f32 %v431, %v431
        %v439 = vmul.f32 %v434, %v434
        %v440 = vmul.f32 %v438, %v264
        %v441 = vmul.f32 %v439, %v265
        %v442 = vadd.f32 %v440, %v441
        %v443 = vrot.slane %v442, 4
        %v444 = vadd.f32 %v442, %v443
        %v445 = vrot.slane %v444, 2
        %v446 = vadd.f32 %v444, %v445
        %v447 = vrot.slane %v446, 1
        %v448 = vadd.f32 %v446, %v447
        %v449 = vadd.f32 %v437, %v448
        %v450 = vlaneseq
        %vm451 = vcmp.ge.s32.totalorder %v450, 0
        %vm452 = vcmp.lt.s32.totalorder %v450, 128
        %vm453 = vmand %vm451, %vm452
        %454 = vst.msk [vmem:[#allocation5] sm:$0x1] %vm453, %v449
        %v455 = vld [vmem:[#allocation4] sm:$0xff]
        %v456 = vld [vmem:[#allocation4 + $0x8] sm:$0xff]
        %v457 = vld [vmem:[#allocation9 + $0x4] sm:$0xf]
        %v458 = vld [vmem:[#allocation9 + $0xc] sm:$0xf]
        %v459 = vld [vmem:[#allocation9 + $0x14] sm:$0xf]
        %v460 = vld [vmem:[#allocation9 + $0x1c] sm:$0xf]
        %v461 = vld [vmem:[#allocation9 + $0x24] sm:$0xf]
        %v462 = vld [vmem:[#allocation9 + $0x2c] sm:$0xf]
        %v463 = vld [vmem:[#allocation9 + $0x34] sm:$0xf]
        %v464 = vld [vmem:[#allocation9 + $0x3c] sm:$0xf]
        %v465 = vld [vmem:[#allocation9 + $0x44] sm:$0xf]
        %v466 = vld [vmem:[#allocation9 + $0x4c] sm:$0xf]
        %v467 = vld [vmem:[#allocation9 + $0x54] sm:$0xf]
        %v468 = vld [vmem:[#allocation9 + $0x5c] sm:$0xf]
        %v469 = vld [vmem:[#allocation9 + $0x64] sm:$0xf]
        %v470 = vld [vmem:[#allocation9 + $0x6c] sm:$0xf]
        %v471 = vld [vmem:[#allocation9 + $0x74] sm:$0xf]
        %v472 = vld [vmem:[#allocation9 + $0x7c] sm:$0xf]
        %v473 = vld [vmem:[#allocation9 + $0x84] sm:$0xf]
        %v474 = vld [vmem:[#allocation9 + $0x8c] sm:$0xf]
        %v475 = vld [vmem:[#allocation9 + $0x94] sm:$0xf]
        %v476 = vld [vmem:[#allocation9 + $0x9c] sm:$0xf]
        %v477 = vld [vmem:[#allocation9 + $0xa4] sm:$0xf]
        %v478 = vld [vmem:[#allocation9 + $0xac] sm:$0xf]
        %v479 = vld [vmem:[#allocation9 + $0xb4] sm:$0xf]
        %v480 = vld [vmem:[#allocation9 + $0xbc] sm:$0xf]
        %v481 = vld [vmem:[#allocation9 + $0xc4] sm:$0xf]
        %v482 = vld [vmem:[#allocation9 + $0xcc] sm:$0xf]
        %v483 = vld [vmem:[#allocation9 + $0xd4] sm:$0xf]
        %v484 = vld [vmem:[#allocation9 + $0xdc] sm:$0xf]
        %v485 = vld [vmem:[#allocation9 + $0xe4] sm:$0xf]
        %v486 = vld [vmem:[#allocation9 + $0xec] sm:$0xf]
        %v487 = vld [vmem:[#allocation9 + $0xf4] sm:$0xf]
        %v488 = vld [vmem:[#allocation9 + $0xfc] sm:$0xf]
        %v521 = vunpack.c.l.b16 %v457
        %v522 = vunpack.c.l.b16 %v458
        %v523 = vunpack.c.l.b16 %v459
        %v524 = vunpack.c.l.b16 %v460
        %v525 = vunpack.c.l.b16 %v461
        %v526 = vunpack.c.l.b16 %v462
        %v527 = vunpack.c.l.b16 %v463
        %v528 = vunpack.c.l.b16 %v464
        %v529 = vunpack.c.l.b16 %v465
        %v530 = vunpack.c.l.b16 %v466
        %v531 = vunpack.c.l.b16 %v467
        %v532 = vunpack.c.l.b16 %v468
        %v533 = vunpack.c.l.b16 %v469
        %v534 = vunpack.c.l.b16 %v470
        %v535 = vunpack.c.l.b16 %v471
        %v536 = vunpack.c.l.b16 %v472
        %v537 = vunpack.c.l.b16 %v473
        %v538 = vunpack.c.l.b16 %v474
        %v539 = vunpack.c.l.b16 %v475
        %v540 = vunpack.c.l.b16 %v476
        %v541 = vunpack.c.l.b16 %v477
        %v542 = vunpack.c.l.b16 %v478
        %v543 = vunpack.c.l.b16 %v479
        %v544 = vunpack.c.l.b16 %v480
        %v545 = vunpack.c.l.b16 %v481
        %v546 = vunpack.c.l.b16 %v482
        %v547 = vunpack.c.l.b16 %v483
        %v548 = vunpack.c.l.b16 %v484
        %v549 = vunpack.c.l.b16 %v485
        %v550 = vunpack.c.l.b16 %v486
        %v551 = vunpack.c.l.b16 %v487
        %v552 = vunpack.c.l.b16 %v488
        %v553 = vpack.c.b16 %v522, %v521
        %v554 = vpack.c.b16 %v524, %v523
        %v555 = vpack.c.b16 %v526, %v525
        %v556 = vpack.c.b16 %v528, %v527
        %v557 = vpack.c.b16 %v530, %v529
        %v558 = vpack.c.b16 %v532, %v531
        %v559 = vpack.c.b16 %v534, %v533
        %v560 = vpack.c.b16 %v536, %v535
        %v561 = vpack.c.b16 %v538, %v537
        %v562 = vpack.c.b16 %v540, %v539
        %v563 = vpack.c.b16 %v542, %v541
        %v564 = vpack.c.b16 %v544, %v543
        %v565 = vpack.c.b16 %v546, %v545
        %v566 = vpack.c.b16 %v548, %v547
        %v567 = vpack.c.b16 %v550, %v549
        %v568 = vpack.c.b16 %v552, %v551
        %585 = vmatprep.subr.bf16.mxu0 0
        %586 = vmatpush1.bf16.msra.mxu0 %v553
        %587 = vmatprep.subr.bf16.mxu0 0
        %588 = vmatpush1.bf16.msra.mxu0 %v554
        %589 = vmatprep.subr.bf16.mxu0 0
        %590 = vmatpush1.bf16.msra.mxu0 %v555
        %591 = vmatprep.subr.bf16.mxu0 0
        %592 = vmatpush1.bf16.msra.mxu0 %v556
        %593 = vmatprep.subr.bf16.mxu0 0
        %594 = vmatpush1.bf16.msra.mxu0 %v557
        %595 = vmatprep.subr.bf16.mxu0 0
        %596 = vmatpush1.bf16.msra.mxu0 %v558
        %597 = vmatprep.subr.bf16.mxu0 0
        %598 = vmatpush1.bf16.msra.mxu0 %v559
        %599 = vmatprep.subr.bf16.mxu0 0
        %600 = vmatpush1.bf16.msra.mxu0 %v560
        %601 = vmatprep.subr.bf16.mxu0 0
        %602 = vmatpush1.bf16.msra.mxu0 %v561
        %603 = vmatprep.subr.bf16.mxu0 0
        %604 = vmatpush1.bf16.msra.mxu0 %v562
        %605 = vmatprep.subr.bf16.mxu0 0
        %606 = vmatpush1.bf16.msra.mxu0 %v563
        %607 = vmatprep.subr.bf16.mxu0 0
        %608 = vmatpush1.bf16.msra.mxu0 %v564
        %609 = vmatprep.subr.bf16.mxu0 0
        %610 = vmatpush1.bf16.msra.mxu0 %v565
        %611 = vmatprep.subr.bf16.mxu0 0
        %612 = vmatpush1.bf16.msra.mxu0 %v566
        %613 = vmatprep.subr.bf16.mxu0 0
        %614 = vmatpush1.bf16.msra.mxu0 %v567
        %615 = vmatprep.subr.bf16.mxu0 0
        %616 = vmatpush1.bf16.msra.mxu0 %v568
        %617 = vmatprep.mubr.bf16.mxu0 %v456
        %618 = vmatmul.mubr.bf16.gmra.mrb[0].mxu0 %v455
        %v619 = vpop.f32.mrb[0].mxu0
        %v620 = vadd.f32 0.0, %v619
        %v621 = vpop.f32.mrb[0].mxu0
        %v622 = vpop.f32.mrb[0].mxu0
        %v623 = vadd.f32 0.0, %v622
        %v624 = vpop.f32.mrb[0].mxu0
        %625 = vdwg.mxu0
        %v626 = vld [vmem:[#allocation5 + $0x1] sm:$0x1]
        %v627 = vmul.f32 %v620, %v620
        %v628 = vmul.f32 %v623, %v623
        %v629 = vmul.f32 %v627, %v264
        %v630 = vmul.f32 %v628, %v265
        %v631 = vadd.f32 %v629, %v630
        %v632 = vrot.slane %v631, 4
        %v633 = vadd.f32 %v631, %v632
        %v634 = vrot.slane %v633, 2
        %v635 = vadd.f32 %v633, %v634
        %v636 = vrot.slane %v635, 1
        %v637 = vadd.f32 %v635, %v636
        %v638 = vadd.f32 %v626, %v637
        %639 = vst.msk [vmem:[#allocation5 + $0x1] sm:$0x1] %vm453, %v638
        %p640 = scmp.eq.s32.totalorder %s25, 2
        // Predicated region
        $region41: #{tpu_custom_call.1} parent=27 // pred_check
          %p641 = pneg %p640
        $region42: #{tpu_custom_call.1} parent=27 // pred_check_branch
          %643 = sbr.rel (%p641) target = $region44
        $region43: #{tpu_custom_call.1} parent=27 // pred_region
          %v644 = vld [vmem:[#allocation5] sm:$0x3]
          %v645 = vlaneseq
          %v646 = vand.u32 %v645, 127
          %vm647 = vcmp.eq.s32.totalorder %v646, 0
          %v649 = vlaneseq
          %v650 = vshrl.u32 %v649, 7
          %v651 = vsub.s32 1, %v650
          %v652 = vrot.slane %v644, %v651
          %v654 = vsel %vm647, 0.0, %v652
          %v655 = vadd.f32 %v644, %v654
          %v656 = vrsqrt.pop %v655
          %v657 = vmul.f32 %v655, %v656
          %vm658 = vcmp.eq.f32.partialorder %v655, inf
          %v659 = vsel %vm658, %v655, %v657
          %vm660 = vcmp.eq.f32.partialorder %v655, 0.0
          %v661 = vand.u32 %v655, 2147483648
          %v662 = vsel %vm660, %v661, %v659
          %v663 = vrot.slane %v644, 1
          %v665 = vrsqrt.pop %v663
          %v666 = vmul.f32 %v663, %v665
          %vm667 = vcmp.eq.f32.partialorder %v663, inf
          %v668 = vsel %vm667, %v663, %v666
          %vm669 = vcmp.eq.f32.partialorder %v663, 0.0
          %v670 = vand.u32 %v663, 2147483648
          %v671 = vsel %vm669, %v670, %v668
          %v674 = vcombine.low %v662, %v671
          %v676 = vunpack.c.l.s4 1966171168
          %v677 = vunpack.c.0.s8 %v676
          %v678 = vlaneseq
          %v679 = vshrl.u32 %v678, 7
          %v680 = vsub.s32 %v677, %v679
          %v681 = vrot.slane %v674, %v680
          %v683 = vunpack.c.l.s4 1966171168
          %v684 = vunpack.c.0.s8 %v683
          %v685 = vlaneseq
          %v686 = vshrl.u32 %v685, 7
          %v687 = vsub.s32 %v684, %v686
          %v688 = vrot.slane %v681, %v687
          %vm690 = vcmp.lt.s32.totalorder %v450, 256
          %vm691 = vmand %vm451, %vm690
          %692 = vst.msk [vmem:[%s192] sm:$0x3] %vm691, %v688
        $region44: #{tpu_custom_call.1} parent=27 // pred_fallthru
          _
        %s693 = sand.u32 %s89, 1
        %s694 = scalar_lea.sflag [#allocation8], %s693
        %s695 = sand.u32 %s89, 1
        %s696 = smul.addr %s695, 2
        %s697 = scalar_lea.vmem [#allocation11], %s696
        // Predicated region
        $region45: #{tpu_custom_call.1} parent=27 // pred_check
          %p698 = pneg %p99
        $region46: #{tpu_custom_call.1} parent=27 // pred_check_branch
          %700 = sbr.rel (%p698) target = $region48
        $region47: #{tpu_custom_call.1} parent=27 // pred_region
          %s702 = ssub.s32 32, 32
          %703 = vsyncadd %s694, %s702
          %s704 = smul.addr %s24, 2
          %s705 = smul.addr %s704, 16
          %s706 = scalar_lea.hbm %s2, %s705
          %s708 = sshll.u32 %s697, 4
          %s709 = int_to_ptr.vmem [resolvable:$true] %s708
          %711 = dma.vmem_to_hbm [thread:$0]  %s709, 32, %s706, %s694
        $region48: #{tpu_custom_call.1} parent=27 // pred_fallthru
          _
      $region28: #{tpu_custom_call.1} parent=5 // pred_fallthru
        _
      %p712 = scmp.le.s32.totalorder 2, %s15
      // Predicated region
      $region49: #{tpu_custom_call.1} parent=5 // pred_check
        %p713 = pneg %p712
      $region50: #{tpu_custom_call.1} parent=5 // pred_check_branch
        %715 = sbr.rel (%p713) target = $region52
      $region51: #{tpu_custom_call.1} parent=5 // pred_region
        %s716 = ssub.s32 %s15, 2
        // Predicated region
        $region53: #{tpu_custom_call.1} parent=51 // pred_check
          %p717 = pneg %p105
        $region54: #{tpu_custom_call.1} parent=51 // pred_check_branch
          %719 = sbr.rel (%p717) target = $region56
        $region55: #{tpu_custom_call.1} parent=51 // pred_region
          %s720 = sand.u32 %s90, 1
          %s721 = scalar_lea.sflag [#allocation8], %s720
          %s722 = sand.u32 %s90, 1
          %s723 = smul.addr %s722, 2
          %s724 = scalar_lea.vmem [#allocation11], %s723
          %725 = dma.done %s721, 32
        $region56: #{tpu_custom_call.1} parent=51 // pred_fallthru
          _
      $region52: #{tpu_custom_call.1} parent=5 // pred_fallthru
        _
    $region6: #{tpu_custom_call.1} parent=1 // loop_footer
      %s19 = sadd.s32 1, %s15
    $region7: #{tpu_custom_call.1} parent=1 // loop_footer_branch
      %14 = sbr.rel target = $region3
    $region8: #{tpu_custom_call.1} parent=1 // loop_exit
      _
    %726 = vsyncpa [#allocation7], 1
    %s727 = scalar_lea.sflag [#allocation7], 1
    %728 = vsyncpa %s727, 1
    %729 = vsyncpa [#allocation10], 1
    %730 = vsyncpa [#allocation8], 1
    %s731 = scalar_lea.sflag [#allocation8], 1
    %732 = vsyncpa %s731, 1

</llo_original>
